<compile_context>
chip_gen: v7x
topology: tpu7x:2x2x1
jax: 0.10.0
libtpu: 0.0.40
codegen_flags: <defaults>
</compile_context>

<pallas_src>
import functools

import jax
import jax.numpy as jnp
from jax.experimental import pallas as pl
from jax.experimental.pallas import tpu as pltpu


def _round_up(n, m):
    return ((n + m - 1) // m) * m


def _ffn_resident_kernel(x_ref, w1_ref, b1_ref, w2_ref, b2_ref, o_ref, acc_ref,
                         *, block_h, approximate):
    # Grid: (row_tiles,).  W1/W2/b1/b2 are fully VMEM-resident (constant index_map);
    # the hidden dim is walked in-kernel so the f32 intermediate is (block_m, block_h).
    #   x_ref:  (tm, Cp)  bf16     w1_ref: (Cp, Hp) bf16     b1_ref: (1, Hp) f32
    #   w2_ref: (Hp, Cp)  bf16     b2_ref: (1, Cp)  f32
    #   o_ref:  (tm, Cp)  out dtype; acc_ref: (tm, Cp) f32 scratch
    n_chunks = w1_ref.shape[1] // block_h

    # Fold b2 into the accumulator init (saves a zero-fill store + an elementwise add).
    acc_ref[...] = jnp.broadcast_to(b2_ref[...], acc_ref.shape)

    def body(c, carry):
        off = pl.multiple_of(c * block_h, block_h)
        h = jnp.dot(x_ref[...], w1_ref[:, pl.ds(off, block_h)],
                    preferred_element_type=jnp.float32)
        h = h + b1_ref[:, pl.ds(off, block_h)]
        # tanh-approx GELU lowers to the EUP slot (VALU is the binding slot otherwise).
        h = jax.nn.gelu(h, approximate=approximate)
        acc_ref[...] += jnp.dot(h.astype(w2_ref.dtype), w2_ref[pl.ds(off, block_h), :],
                                preferred_element_type=jnp.float32)
        return carry

    jax.lax.fori_loop(0, n_chunks, body, 0, unroll=(n_chunks <= 8))

    # Dropout in eval mode == identity.
    o_ref[...] = acc_ref[...].astype(o_ref.dtype)


def _ffn_streaming_kernel(x_ref, w1_ref, b1_ref, w2_ref, b2_ref, o_ref, acc_ref,
                          *, approximate):
    # Fallback when weights don't fit VMEM.  Grid: (row_tiles, hidden_chunks);
    # axis 1 is the reduction over the 4C hidden dim, weight chunks are streamed.
    j = pl.program_id(1)

    @pl.when(j == 0)
    def _init():
        acc_ref[...] = jnp.broadcast_to(b2_ref[...], acc_ref.shape)

    h = jnp.dot(x_ref[...], w1_ref[...], preferred_element_type=jnp.float32)
    h = h + b1_ref[...]
    h = jax.nn.gelu(h, approximate=approximate)
    acc_ref[...] += jnp.dot(h.astype(w2_ref.dtype), w2_ref[...],
                            preferred_element_type=jnp.float32)

    @pl.when(j == pl.num_programs(1) - 1)
    def _finalize():
        o_ref[...] = acc_ref[...].astype(o_ref.dtype)


def _vmem_limit_bytes():
    try:
        info = pltpu.get_tpu_info()
        cap = int(getattr(info, "vmem_capacity_bytes", 0)) or 128 * 1024 * 1024
    except Exception:
        cap = 64 * 1024 * 1024  # conservative (v7x per-TC size)
    # ~20% headroom for compiler scratch; cap at 100 MiB on 128 MiB parts.
    return max(32 * 1024 * 1024, min(int(cap * 0.8), 100 * 1024 * 1024))


@functools.partial(jax.jit,
                   static_argnames=("block_m", "block_h", "out_dtype", "gelu_approximate"))
def feed_forward(x, w1, b1, w2, b2, *, block_m=None, block_h=None,
                 out_dtype=None, gelu_approximate=True):
    """x: (B, T, C).  w1: (C, 4C), b1: (4C,), w2: (4C, C), b2: (C,).  Returns (B, T, C)."""
    B, T, C = x.shape
    H = w1.shape[1]  # 4*C
    M = B * T
    out_dtype = x.dtype if out_dtype is None else jnp.dtype(out_dtype)
    out_itemsize = jnp.dtype(out_dtype).itemsize

    # Lane-dense padding of the feature dims (only does work for toy C < 128).
    Cp = _round_up(C, 128)
    Hp = _round_up(H, 128)

    # Hidden-dim chunk: multiple of 128 that divides Hp.
    if block_h is None:
        block_h = min(512, Hp)
    if Hp % block_h != 0 or block_h % 128 != 0:
        block_h = 128
        while Hp % (block_h * 2) == 0 and block_h * 2 <= 512:
            block_h *= 2

    # Row tile: target 512, keep >= 2 row tiles when possible (pipelining + megacore).
    if block_m is None:
        block_m = 512
        while block_m > 8 and block_m * 2 > M:
            block_m //= 2
    block_m = max(8, block_m)
    Mp = _round_up(M, block_m)
    n_row_tiles = Mp // block_m

    # Cast / pad operands.  bf16 inputs are taken as-is (no extra HBM pass).
    x2d = x.reshape(M, C)
    if x2d.dtype != jnp.bfloat16:
        x2d = x2d.astype(jnp.bfloat16)
    w1b = w1.astype(jnp.bfloat16)
    w2b = w2.astype(jnp.bfloat16)
    b1f = b1.astype(jnp.float32)
    b2f = b2.astype(jnp.float32)
    if (Mp, Cp) != (M, C):
        x2d = jnp.pad(x2d, ((0, Mp - M), (0, Cp - C)))
    if (Cp, Hp) != (C, H):
        w1b = jnp.pad(w1b, ((0, Cp - C), (0, Hp - H)))
        w2b = jnp.pad(w2b, ((0, Hp - H), (0, Cp - C)))
        b1f = jnp.pad(b1f, ((0, Hp - H),))
        b2f = jnp.pad(b2f, ((0, Cp - C),))
    b1_2d = b1f.reshape(1, Hp)
    b2_2d = b2f.reshape(1, Cp)

    # VMEM budget and residency decision (weights counted double-buffered, conservatively).
    vmem_limit = _vmem_limit_bytes()
    resident_bytes = (
        2 * (Cp * Hp * 2 + Hp * Cp * 2)            # W1 + W2 bf16, x2 buffers
        + 2 * block_m * Cp * 2                     # x tile, double-buffered bf16
        + 2 * block_m * Cp * out_itemsize          # out tile, double-buffered
        + block_m * Cp * 4                         # f32 accumulator scratch
        + 2 * block_m * block_h * 4                # (block_m, block_h) intermediate
        + 2 * (Hp * 4 + Cp * 4)                    # biases
    )
    resident = resident_bytes <= vmem_limit

    # Cost hint with the *actual* weight traffic (1x if resident, per-row-tile if streamed).
    weight_hbm_bytes = (Cp * Hp + Hp * Cp) * 2 + Hp * 4 + Cp * 4
    if not resident:
        weight_hbm_bytes *= n_row_tiles
    cost = pl.CostEstimate(
        flops=4 * Mp * Cp * Hp,                    # two matmuls: 2*M*C*H each
        transcendentals=Mp * Hp,                   # one gelu transcendental per hidden elem
        bytes_accessed=Mp * Cp * 2 + weight_hbm_bytes + Mp * Cp * out_itemsize,
    )

    if resident:
        kernel = functools.partial(_ffn_resident_kernel,
                                   block_h=block_h, approximate=gelu_approximate)
        out2d = pl.pallas_call(
            kernel,
            out_shape=jax.ShapeDtypeStruct((Mp, Cp), out_dtype),
            grid_spec=pltpu.PrefetchScalarGridSpec(
                num_scalar_prefetch=0,
                grid=(n_row_tiles,),
                in_specs=[
                    pl.BlockSpec((block_m, Cp), lambda i: (i, 0)),  # x row-tile
                    pl.BlockSpec((Cp, Hp), lambda i: (0, 0)),       # W1, DMA'd once, resident
                    pl.BlockSpec((1, Hp), lambda i: (0, 0)),        # b1, resident
                    pl.BlockSpec((Hp, Cp), lambda i: (0, 0)),       # W2, resident
                    pl.BlockSpec((1, Cp), lambda i: (0, 0)),        # b2, resident
                ],
                out_specs=pl.BlockSpec((block_m, Cp), lambda i: (i, 0)),
                scratch_shapes=[pltpu.VMEM((block_m, Cp), jnp.float32)],
            ),
            compiler_params=pltpu.CompilerParams(
                dimension_semantics=("parallel",),
                vmem_limit_bytes=vmem_limit,
            ),
            cost_estimate=cost,
        )(x2d, w1b, b1_2d, w2b, b2_2d)
    else:
        kernel = functools.partial(_ffn_streaming_kernel, approximate=gelu_approximate)
        out2d = pl.pallas_call(
            kernel,
            out_shape=jax.ShapeDtypeStruct((Mp, Cp), out_dtype),
            grid_spec=pltpu.PrefetchScalarGridSpec(
                num_scalar_prefetch=0,
                grid=(n_row_tiles, Hp // block_h),
                in_specs=[
                    pl.BlockSpec((block_m, Cp), lambda i, j: (i, 0)),   # x row-tile
                    pl.BlockSpec((Cp, block_h), lambda i, j: (0, j),    # W1 chunk, streamed
                                 pipeline_mode=pl.Buffered(3)),
                    pl.BlockSpec((1, block_h), lambda i, j: (0, j)),    # b1 chunk
                    pl.BlockSpec((block_h, Cp), lambda i, j: (j, 0),    # W2 chunk, streamed
                                 pipeline_mode=pl.Buffered(3)),
                    pl.BlockSpec((1, Cp), lambda i, j: (0, 0)),         # b2
                ],
                out_specs=pl.BlockSpec((block_m, Cp), lambda i, j: (i, 0)),
                scratch_shapes=[pltpu.VMEM((block_m, Cp), jnp.float32)],
            ),
            compiler_params=pltpu.CompilerParams(
                dimension_semantics=("parallel", "arbitrary"),
                vmem_limit_bytes=vmem_limit,
            ),
            cost_estimate=cost,
        )(x2d, w1b, b1_2d, w2b, b2_2d)

    return out2d[:M, :C].reshape(B, T, C)


def init_params(key, n_embd):
    """Deterministic init mirroring nn.Linear default (uniform +-1/sqrt(fan_in))."""
    hidden = 4 * n_embd
    k1, k2, k3, k4 = jax.random.split(key, 4)
    bound1 = 1.0 / jnp.sqrt(n_embd)
    bound2 = 1.0 / jnp.sqrt(hidden)
    w1 = jax.random.uniform(k1, (n_embd, hidden), jnp.float32, -bound1, bound1)
    b1 = jax.random.uniform(k2, (hidden,), jnp.float32, -bound1, bound1)
    w2 = jax.random.uniform(k3, (hidden, n_embd), jnp.float32, -bound2, bound2)
    b2 = jax.random.uniform(k4, (n_embd,), jnp.float32, -bound2, bound2)
    return w1, b1, w2, b2


if __name__ == "__main__":
    # Config from the spec: n_embd=32, block_size (seq len T)=16; small batch=2.
    n_embd = 32
    B, T = 2, 16

    key = jax.random.PRNGKey(0)
    kx, kp = jax.random.split(key)
    x = jax.random.normal(kx, (B, T, n_embd), jnp.float32)
    w1, b1, w2, b2 = init_params(kp, n_embd)

    out = feed_forward(x, w1, b1, w2, b2)
    out = jax.block_until_ready(out)

    # Reference in plain JAX f32 with the module's exact-erf GELU (eval-mode dropout).
    # Kernel uses bf16 MXU operands + tanh-approx GELU, so compare with relaxed tolerance.
    ref = jax.nn.gelu(x @ w1 + b1, approximate=False) @ w2 + b2
    assert out.shape == (B, T, n_embd)
    assert jnp.allclose(out, ref, atol=5e-2, rtol=5e-2)

    print("KERNEL_OK")
</pallas_src>

<mosaic_0001>
module attributes {stable_mosaic.version = 11 : i64} {
  func.func @_ffn_resident_kernel(%arg0: i32, %arg1: memref<16x128xbf16, #tpu.memory_space<vmem>>, %arg2: memref<128x128xbf16, #tpu.memory_space<vmem>>, %arg3: memref<1x128xf32, #tpu.memory_space<vmem>>, %arg4: memref<128x128xbf16, #tpu.memory_space<vmem>>, %arg5: memref<1x128xf32, #tpu.memory_space<vmem>>, %arg6: memref<16x128xf32, #tpu.memory_space<vmem>>, %arg7: memref<16x128xf32, #tpu.memory_space<vmem>>) attributes {dimension_semantics = [#tpu.dimension_semantics<parallel>], iteration_bounds = array<i64: 2>, scalar_prefetch = 0 : i64, scratch_operands = 1 : i64, tpu.core_type = #tpu.core_type<tc>, window_params = [{transform_indices = @transform_0, window_bounds = array<i64: 16, 128>}, {pipeline_mode = #tpu.pipeline_mode<synchronous>, transform_indices = @transform_1, window_bounds = array<i64: 128, 128>}, {pipeline_mode = #tpu.pipeline_mode<synchronous>, transform_indices = @transform_2, window_bounds = array<i64: 1, 128>}, {pipeline_mode = #tpu.pipeline_mode<synchronous>, transform_indices = @transform_3, window_bounds = array<i64: 128, 128>}, {pipeline_mode = #tpu.pipeline_mode<synchronous>, transform_indices = @transform_4, window_bounds = array<i64: 1, 128>}, {transform_indices = @transform_5, window_bounds = array<i64: 16, 128>}]} {
    %c0 = arith.constant 0 : index
    %c0_0 = arith.constant 0 : index
    %0 = vector.load %arg5[%c0, %c0_0] : memref<1x128xf32, #tpu.memory_space<vmem>>, vector<1x128xf32>
    %1 = vector.shape_cast %0 : vector<1x128xf32> to vector<1x128xf32>
    %2 = vector.broadcast %1 : vector<1x128xf32> to vector<16x128xf32>
    %c0_1 = arith.constant 0 : index
    %c0_2 = arith.constant 0 : index
    %3 = vector.load %arg7[%c0_1, %c0_2] : memref<16x128xf32, #tpu.memory_space<vmem>>, vector<16x128xf32>
    tpu.vector_store %arg7[%c0_1, %c0_2], %2 {strides = array<i32>} : memref<16x128xf32, #tpu.memory_space<vmem>>, vector<16x128xf32>,
    %c0_i32 = arith.constant 0 : i32
    %c128_i32 = arith.constant 128 : i32
    %4 = arith.muli %c0_i32, %c128_i32 : i32
    %5 = tpu.assume_multiple %4, 128 : i32
    %c0_3 = arith.constant 0 : index
    %c0_4 = arith.constant 0 : index
    %6 = vector.load %arg1[%c0_3, %c0_4] : memref<16x128xbf16, #tpu.memory_space<vmem>>, vector<16x128xbf16>
    %c0_5 = arith.constant 0 : index
    %7 = arith.index_cast %5 : i32 to index
    %8 = vector.load %arg2[%c0_5, %7] : memref<128x128xbf16, #tpu.memory_space<vmem>>, vector<128x128xbf16>
    %cst = arith.constant dense<0.000000e+00> : vector<16x128xf32>
    %9 = tpu.matmul %6, %8, %cst {dimension_numbers = #tpu.dot_dimension_numbers<[1], [0], [0], [1], [0, 0, 1, 1], [], []>} : vector<16x128xbf16>, vector<128x128xbf16>, vector<16x128xf32> -> vector<16x128xf32>
    %c0_6 = arith.constant 0 : index
    %10 = arith.index_cast %5 : i32 to index
    %11 = vector.load %arg3[%c0_6, %10] : memref<1x128xf32, #tpu.memory_space<vmem>>, vector<1x128xf32>
    %12 = vector.broadcast %11 : vector<1x128xf32> to vector<16x128xf32>
    %13 = arith.addf %9, %12 : vector<16x128xf32>
    %14 = arith.mulf %13, %13 : vector<16x128xf32>
    %15 = arith.mulf %13, %14 : vector<16x128xf32>
    %cst_7 = arith.constant 4.471500e-02 : f32
    %16 = vector.broadcast %cst_7 : f32 to vector<16x128xf32>
    %17 = arith.mulf %16, %15 : vector<16x128xf32>
    %18 = arith.addf %13, %17 : vector<16x128xf32>
    %cst_8 = arith.constant 0.797884583 : f32
    %19 = vector.broadcast %cst_8 : f32 to vector<16x128xf32>
    %20 = arith.mulf %19, %18 : vector<16x128xf32>
    %21 = math.tanh %20 : vector<16x128xf32>
    %cst_9 = arith.constant 1.000000e+00 : f32
    %22 = vector.broadcast %cst_9 : f32 to vector<16x128xf32>
    %23 = arith.addf %22, %21 : vector<16x128xf32>
    %cst_10 = arith.constant 5.000000e-01 : f32
    %24 = vector.broadcast %cst_10 : f32 to vector<16x128xf32>
    %25 = arith.mulf %24, %23 : vector<16x128xf32>
    %26 = arith.mulf %13, %25 : vector<16x128xf32>
    %c0_11 = arith.constant 0 : index
    %c0_12 = arith.constant 0 : index
    %27 = vector.load %arg7[%c0_11, %c0_12] : memref<16x128xf32, #tpu.memory_space<vmem>>, vector<16x128xf32>
    %28 = arith.truncf %26 : vector<16x128xf32> to vector<16x128xbf16>
    %29 = arith.index_cast %5 : i32 to index
    %c0_13 = arith.constant 0 : index
    %30 = vector.load %arg4[%29, %c0_13] : memref<128x128xbf16, #tpu.memory_space<vmem>>, vector<128x128xbf16>
    %cst_14 = arith.constant dense<0.000000e+00> : vector<16x128xf32>
    %31 = tpu.matmul %28, %30, %cst_14 {dimension_numbers = #tpu.dot_dimension_numbers<[1], [0], [0], [1], [0, 0, 1, 1], [], []>} : vector<16x128xbf16>, vector<128x128xbf16>, vector<16x128xf32> -> vector<16x128xf32>
    %32 = arith.addf %27, %31 : vector<16x128xf32>
    %c0_15 = arith.constant 0 : index
    %c0_16 = arith.constant 0 : index
    %33 = vector.load %arg7[%c0_15, %c0_16] : memref<16x128xf32, #tpu.memory_space<vmem>>, vector<16x128xf32>
    tpu.vector_store %arg7[%c0_15, %c0_16], %32 {strides = array<i32>} : memref<16x128xf32, #tpu.memory_space<vmem>>, vector<16x128xf32>,
    %c1_i32 = arith.constant 1 : i32
    %c0_17 = arith.constant 0 : index
    %c0_18 = arith.constant 0 : index
    %34 = vector.load %arg7[%c0_17, %c0_18] : memref<16x128xf32, #tpu.memory_space<vmem>>, vector<16x128xf32>
    %c0_19 = arith.constant 0 : index
    %c0_20 = arith.constant 0 : index
    %35 = vector.load %arg6[%c0_19, %c0_20] : memref<16x128xf32, #tpu.memory_space<vmem>>, vector<16x128xf32>
    tpu.vector_store %arg6[%c0_19, %c0_20], %34 {strides = array<i32>} : memref<16x128xf32, #tpu.memory_space<vmem>>, vector<16x128xf32>,
    return
  }
  func.func @transform_0(%arg0: i32) -> (i32, i32) {
    %c0_i32 = arith.constant 0 : i32
    %c0_i32_0 = arith.constant 0 : i32
    return %arg0, %c0_i32 : i32, i32
  }
  func.func @transform_1(%arg0: i32) -> (i32, i32) {
    %c0_i32 = arith.constant 0 : i32
    %c0_i32_0 = arith.constant 0 : i32
    %c0_i32_1 = arith.constant 0 : i32
    return %c0_i32, %c0_i32_0 : i32, i32
  }
  func.func @transform_2(%arg0: i32) -> (i32, i32) {
    %c0_i32 = arith.constant 0 : i32
    %c0_i32_0 = arith.constant 0 : i32
    %c0_i32_1 = arith.constant 0 : i32
    return %c0_i32, %c0_i32_0 : i32, i32
  }
  func.func @transform_3(%arg0: i32) -> (i32, i32) {
    %c0_i32 = arith.constant 0 : i32
    %c0_i32_0 = arith.constant 0 : i32
    %c0_i32_1 = arith.constant 0 : i32
    return %c0_i32, %c0_i32_0 : i32, i32
  }
  func.func @transform_4(%arg0: i32) -> (i32, i32) {
    %c0_i32 = arith.constant 0 : i32
    %c0_i32_0 = arith.constant 0 : i32
    %c0_i32_1 = arith.constant 0 : i32
    return %c0_i32, %c0_i32_0 : i32, i32
  }
  func.func @transform_5(%arg0: i32) -> (i32, i32) {
    %c0_i32 = arith.constant 0 : i32
    %c0_i32_0 = arith.constant 0 : i32
    return %arg0, %c0_i32 : i32, i32
  }
}

</mosaic_0001>

<llo_original>
// kernel: feed_forward.1
$region0: #{feed_forward.1}
  #allocation0 [shape = 'u32[]', space=smem, size = 0x4, offset = 0x4, fixed_abs, tag = 'smem constant byte address 0x4 - core index']
  #allocation1 [shape = 'u32[144,128]{1,0:T(1,128)}', space=vmem, size = 0x12000, scoped, tag = 'internal scratch']
  #allocation2 [shape = 'f32[16,128]{1,0:T(8,128)}', space=vmem, size = 0x2000, scoped, tag = 'scratch operand']
  %s0 = inlined_call_operand.vmem [shape: bf16[32,128], index: 0, kind: input, shape index: {}]
  %s1 = inlined_call_operand.vmem [shape: bf16[128,128], index: 1, kind: input, shape index: {}]
  %s2 = inlined_call_operand.vmem [shape: f32[1,128], index: 2, kind: input, shape index: {}]
  %s3 = inlined_call_operand.vmem [shape: bf16[128,128], index: 3, kind: input, shape index: {}]
  %s4 = inlined_call_operand.vmem [shape: f32[1,128], index: 4, kind: input, shape index: {}]
  %s5 = inlined_call_operand.hbm [shape: f32[32,128], index: 5, kind: output, shape index: {}]
  %s6 = sld [smem:[#allocation0]]
  $region53: #{feed_forward.1} parent=0
    _
  %s8 = ssub.s32 1, %s6
  %s9 = scalar_select 0, %s8, %s6
  $region1: #{feed_forward.1} parent=0
    #allocation3 [shape = 'u8[16384]{0}', space=vmem, size = 0x4000, scoped, tag = 'output window, operand 0']
    #allocation4 [shape = 's32[2]{0}', space=sflag, size = 0x8, scoped, tag = 'scoped memory for feed_forward.1']
    %10 = vsyncpa [#allocation4], 0
    %s11 = scalar_lea.sflag [#allocation4], 1
    %12 = vsyncpa %s11, 0
    loop: start=0, step=1, limit=4
    $region2: #{feed_forward.1} parent=1 // loop_pre_header
      _
    $region3: #{feed_forward.1} parent=1 // loop_header
      %s14 = sphi 0, %s18
      %p15 = scmp.ge.s32.totalorder %s14, 4
      %s24 = sphi 0, %s26
      %s27 = sphi 0, %s24
      %s28 = sphi 0, %s27
      %s44 = sphi 0, %s28
      %s48 = sphi 0, %s48
      %s50 = sphi 0, %s48
      %s51 = sphi 0, %s50
      %s65 = sphi 0, %s51
      %s69 = sphi 0, %s69
      %s71 = sphi 0, %s69
      %s72 = sphi 0, %s71
      %s86 = sphi 0, %s72
      %s90 = sphi 0, %s90
      %s92 = sphi 0, %s90
      %s93 = sphi 0, %s92
      %s107 = sphi 0, %s93
      %s111 = sphi 0, %s111
      %s113 = sphi 0, %s111
      %s114 = sphi 0, %s113
      %s128 = sphi 0, %s114
      %s134 = sphi 0, %s136
      %s137 = sphi 0, %s134
      %s138 = sphi 0, %s137
      %s154 = sphi 0, %s138
    $region4: #{feed_forward.1} parent=1 // loop_header_branch
      %17 = sbr.rel (%p15) target = $region8
    $region5: #{feed_forward.1} parent=1 // loop_body
      %s19 = ssub.s32 %s14, 1
      %s20 = ssub.s32 %s14, 2
      %s21 = sadd.s32 %s14, 1
      %s22 = ssub.s32 %s14, %s21
      %p23 = scmp.eq.s32.totalorder %s22, 0
      %s25 = sadd.s32 %s24, 1
      %s26 = scalar_select %p23, %s24, %s25
      %p29 = pneg %p23
      %p30 = scmp.eq.s32.totalorder %s14, 1
      %p31 = por %p29, %p30
      %p32 = scmp.ne.s32.totalorder %s24, %s27
      %p33 = scmp.eq.s32.totalorder %s14, 0
      %p34 = por %p32, %p33
      %p35 = scmp.ne.s32.totalorder %s24, %s27
      %p36 = scmp.eq.s32.totalorder %s19, 1
      %p37 = por %p35, %p36
      %p38 = scmp.ne.s32.totalorder %s27, %s28
      %p39 = scmp.eq.s32.totalorder %s19, 0
      %p40 = por %p38, %p39
      %p41 = scmp.ne.s32.totalorder %s27, %s28
      %p42 = scmp.eq.s32.totalorder %s20, 1
      %p43 = por %p41, %p42
      %p45 = scmp.ne.s32.totalorder %s28, %s44
      %p46 = scmp.eq.s32.totalorder %s20, 0
      %p47 = por %p45, %p46
      %s49 = sadd.s32 %s48, 1
      %p52 = scmp.eq.s32.totalorder %s14, 1
      %p53 = scmp.ne.s32.totalorder %s48, %s50
      %p54 = scmp.eq.s32.totalorder %s14, 0
      %p55 = por %p53, %p54
      %p56 = scmp.ne.s32.totalorder %s48, %s50
      %p57 = scmp.eq.s32.totalorder %s19, 1
      %p58 = por %p56, %p57
      %p59 = scmp.ne.s32.totalorder %s50, %s51
      %p60 = scmp.eq.s32.totalorder %s19, 0
      %p61 = por %p59, %p60
      %p62 = scmp.ne.s32.totalorder %s50, %s51
      %p63 = scmp.eq.s32.totalorder %s20, 1
      %p64 = por %p62, %p63
      %p66 = scmp.ne.s32.totalorder %s51, %s65
      %p67 = scmp.eq.s32.totalorder %s20, 0
      %p68 = por %p66, %p67
      %s70 = sadd.s32 %s69, 1
      %p73 = scmp.eq.s32.totalorder %s14, 1
      %p74 = scmp.ne.s32.totalorder %s69, %s71
      %p75 = scmp.eq.s32.totalorder %s14, 0
      %p76 = por %p74, %p75
      %p77 = scmp.ne.s32.totalorder %s69, %s71
      %p78 = scmp.eq.s32.totalorder %s19, 1
      %p79 = por %p77, %p78
      %p80 = scmp.ne.s32.totalorder %s71, %s72
      %p81 = scmp.eq.s32.totalorder %s19, 0
      %p82 = por %p80, %p81
      %p83 = scmp.ne.s32.totalorder %s71, %s72
      %p84 = scmp.eq.s32.totalorder %s20, 1
      %p85 = por %p83, %p84
      %p87 = scmp.ne.s32.totalorder %s72, %s86
      %p88 = scmp.eq.s32.totalorder %s20, 0
      %p89 = por %p87, %p88
      %s91 = sadd.s32 %s90, 1
      %p94 = scmp.eq.s32.totalorder %s14, 1
      %p95 = scmp.ne.s32.totalorder %s90, %s92
      %p96 = scmp.eq.s32.totalorder %s14, 0
      %p97 = por %p95, %p96
      %p98 = scmp.ne.s32.totalorder %s90, %s92
      %p99 = scmp.eq.s32.totalorder %s19, 1
      %p100 = por %p98, %p99
      %p101 = scmp.ne.s32.totalorder %s92, %s93
      %p102 = scmp.eq.s32.totalorder %s19, 0
      %p103 = por %p101, %p102
      %p104 = scmp.ne.s32.totalorder %s92, %s93
      %p105 = scmp.eq.s32.totalorder %s20, 1
      %p106 = por %p104, %p105
      %p108 = scmp.ne.s32.totalorder %s93, %s107
      %p109 = scmp.eq.s32.totalorder %s20, 0
      %p110 = por %p108, %p109
      %s112 = sadd.s32 %s111, 1
      %p115 = scmp.eq.s32.totalorder %s14, 1
      %p116 = scmp.ne.s32.totalorder %s111, %s113
      %p117 = scmp.eq.s32.totalorder %s14, 0
      %p118 = por %p116, %p117
      %p119 = scmp.ne.s32.totalorder %s111, %s113
      %p120 = scmp.eq.s32.totalorder %s19, 1
      %p121 = por %p119, %p120
      %p122 = scmp.ne.s32.totalorder %s113, %s114
      %p123 = scmp.eq.s32.totalorder %s19, 0
      %p124 = por %p122, %p123
      %p125 = scmp.ne.s32.totalorder %s113, %s114
      %p126 = scmp.eq.s32.totalorder %s20, 1
      %p127 = por %p125, %p126
      %p129 = scmp.ne.s32.totalorder %s114, %s128
      %p130 = scmp.eq.s32.totalorder %s20, 0
      %p131 = por %p129, %p130
      %s132 = ssub.s32 %s14, %s21
      %p133 = scmp.eq.s32.totalorder %s132, 0
      %s135 = sadd.s32 %s134, 1
      %s136 = scalar_select %p133, %s134, %s135
      %p139 = pneg %p133
      %p140 = scmp.eq.s32.totalorder %s14, 1
      %p141 = por %p139, %p140
      %p142 = scmp.ne.s32.totalorder %s134, %s137
      %p143 = scmp.eq.s32.totalorder %s14, 0
      %p144 = por %p142, %p143
      %p145 = scmp.ne.s32.totalorder %s134, %s137
      %p146 = scmp.eq.s32.totalorder %s19, 1
      %p147 = por %p145, %p146
      %p148 = scmp.ne.s32.totalorder %s137, %s138
      %p149 = scmp.eq.s32.totalorder %s19, 0
      %p150 = por %p148, %p149
      %p151 = scmp.ne.s32.totalorder %s137, %s138
      %p152 = scmp.eq.s32.totalorder %s20, 1
      %p153 = por %p151, %p152
      %p155 = scmp.ne.s32.totalorder %s138, %s154
      %p156 = scmp.eq.s32.totalorder %s20, 0
      %p157 = por %p155, %p156
      %p158 = scmp.le.s32.totalorder 1, %s14
      %p159 = scmp.lt.s32.totalorder %s14, 3
      %p160 = pnand %p158, %p159
      %p161 = pneg %p160
      // Predicated region
      $region9: #{feed_forward.1} parent=5 // pred_check
        _
      $region10: #{feed_forward.1} parent=5 // pred_check_branch
        %163 = sbr.rel (%p160) target = $region12
      $region11: #{feed_forward.1} parent=5 // pred_region
        %s164 = ssub.s32 %s14, 1
        // Predicated region
        $region13: #{feed_forward.1} parent=11 // pred_check
          %p165 = pneg %p61
        $region14: #{feed_forward.1} parent=11 // pred_check_branch
          %167 = sbr.rel (%p165) target = $region16
        $region15: #{feed_forward.1} parent=11 // pred_region
          _
        $region16: #{feed_forward.1} parent=11 // pred_fallthru
          _
        // Predicated region
        $region17: #{feed_forward.1} parent=11 // pred_check
          %p168 = pneg %p82
        $region18: #{feed_forward.1} parent=11 // pred_check_branch
          %170 = sbr.rel (%p168) target = $region20
        $region19: #{feed_forward.1} parent=11 // pred_region
          _
        $region20: #{feed_forward.1} parent=11 // pred_fallthru
          _
        // Predicated region
        $region21: #{feed_forward.1} parent=11 // pred_check
          %p171 = pneg %p103
        $region22: #{feed_forward.1} parent=11 // pred_check_branch
          %173 = sbr.rel (%p171) target = $region24
        $region23: #{feed_forward.1} parent=11 // pred_region
          _
        $region24: #{feed_forward.1} parent=11 // pred_fallthru
          _
        // Predicated region
        $region25: #{feed_forward.1} parent=11 // pred_check
          %p174 = pneg %p124
        $region26: #{feed_forward.1} parent=11 // pred_check_branch
          %176 = sbr.rel (%p174) target = $region28
        $region27: #{feed_forward.1} parent=11 // pred_region
          _
        $region28: #{feed_forward.1} parent=11 // pred_fallthru
          _
      $region12: #{feed_forward.1} parent=5 // pred_fallthru
        _
      %p177 = scmp.lt.s32.totalorder %s14, 2
      // Predicated region
      $region29: #{feed_forward.1} parent=5 // pred_check
        %p178 = pneg %p177
      $region30: #{feed_forward.1} parent=5 // pred_check_branch
        %180 = sbr.rel (%p178) target = $region32
      $region31: #{feed_forward.1} parent=5 // pred_region
        // Predicated region
        $region33: #{feed_forward.1} parent=31 // pred_check
          %p181 = pneg %p34
        $region34: #{feed_forward.1} parent=31 // pred_check_branch
          %183 = sbr.rel (%p181) target = $region36
        $region35: #{feed_forward.1} parent=31 // pred_region
          %s184 = smul.u32 2, %s14
          %p185 = scmp.lt.s32.totalorder %s184, 3
          %s186 = scalar_select %p185, %s184, 3
          %s187 = smul.addr %s186, 4
          %s188 = scalar_lea.vmem %s0, %s187
          %s189 = smul.u32 2, %s14
        $region36: #{feed_forward.1} parent=31 // pred_fallthru
          _
      $region32: #{feed_forward.1} parent=5 // pred_fallthru
        _
      %p190 = scmp.le.s32.totalorder 1, %s14
      %p191 = scmp.lt.s32.totalorder %s14, 3
      %p192 = pnand %p190, %p191
      %p193 = pneg %p192
      // Predicated region
      $region37: #{feed_forward.1} parent=5 // pred_check
        _
      $region38: #{feed_forward.1} parent=5 // pred_check_branch
        %195 = sbr.rel (%p192) target = $region40
      $region39: #{feed_forward.1} parent=5 // pred_region
        %s196 = ssub.s32 %s14, 1
        %s197 = smul.u32 2, %s19
        %p198 = scmp.lt.s32.totalorder %s197, 3
        %s199 = scalar_select %p198, %s197, 3
        %s200 = smul.addr %s199, 4
        %s201 = scalar_lea.vmem %s0, %s200
        %p202 = pneg %p40
        %p203 = pneg %p37
        %p204 = pneg %p61
        %p205 = pneg %p58
        %p206 = pneg %p82
        %p207 = pneg %p79
        %p208 = pneg %p103
        %p209 = pneg %p100
        %p210 = pneg %p124
        %p211 = pneg %p121
        %p212 = pneg %p150
        %p213 = pneg %p147
        %s214 = sand.u32 %s137, 1
        %s215 = scalar_lea.sflag [#allocation4], %s214
        %s216 = sand.u32 %s137, 1
        %s217 = smul.addr %s216, 16
        %s218 = scalar_lea.vmem [#allocation3], %s217
        %s219 = smul.u32 2, %s19
        %p220 = scmp.lt.s32.totalorder %s219, 3
        %s221 = scalar_select %p220, %s219, 3
        %s222 = smul.addr %s221, 4
        %s223 = scalar_lea.vmem %s0, %s222
        %s224 = smul.u32 2, %s19
        %s225 = smul.u32 2, %s19
        %v227 = vld [vmem:[%s4] sm:$0x1]
        %v229 = vlaneseq
        %v230 = vshrl.u32 %v229, 7
        %v231 = vsub.s32 0, %v230
        %v232 = vrot.slane %v227, %v231
        %234 = vst [vmem:[#allocation2] sm:$0xff] %v232
        %235 = vst [vmem:[#allocation2 + $0x8] sm:$0xff] %v232
        %v236 = vld [vmem:[%s223] sm:$0xf]
        %v237 = vld [vmem:[%s223 + $0x4] sm:$0xf]
        %v238 = vld [vmem:[%s1] sm:$0xf]
        %v239 = vld [vmem:[%s1 + $0x4] sm:$0xf]
        %v240 = vld [vmem:[%s1 + $0x8] sm:$0xf]
        %v241 = vld [vmem:[%s1 + $0xc] sm:$0xf]
        %v242 = vld [vmem:[%s1 + $0x10] sm:$0xf]
        %v243 = vld [vmem:[%s1 + $0x14] sm:$0xf]
        %v244 = vld [vmem:[%s1 + $0x18] sm:$0xf]
        %v245 = vld [vmem:[%s1 + $0x1c] sm:$0xf]
        %v246 = vld [vmem:[%s1 + $0x20] sm:$0xf]
        %v247 = vld [vmem:[%s1 + $0x24] sm:$0xf]
        %v248 = vld [vmem:[%s1 + $0x28] sm:$0xf]
        %v249 = vld [vmem:[%s1 + $0x2c] sm:$0xf]
        %v250 = vld [vmem:[%s1 + $0x30] sm:$0xf]
        %v251 = vld [vmem:[%s1 + $0x34] sm:$0xf]
        %v252 = vld [vmem:[%s1 + $0x38] sm:$0xf]
        %v253 = vld [vmem:[%s1 + $0x3c] sm:$0xf]
        %v254 = vld [vmem:[%s2] sm:$0x1]
        %v256 = vlaneseq
        %v257 = vshrl.u32 %v256, 7
        %v258 = vsub.s32 0, %v257
        %v259 = vrot.slane %v254, %v258
        %v263 = vunpack.c.l.b16 %v236
        %v264 = vunpack.c.l.b16 %v237
        %v265 = vpack.c.b16 %v264, %v263
        %v283 = vunpack.c.l.b16 %v238
        %v284 = vunpack.c.l.b16 %v239
        %v285 = vunpack.c.l.b16 %v240
        %v286 = vunpack.c.l.b16 %v241
        %v287 = vunpack.c.l.b16 %v242
        %v288 = vunpack.c.l.b16 %v243
        %v289 = vunpack.c.l.b16 %v244
        %v290 = vunpack.c.l.b16 %v245
        %v291 = vunpack.c.l.b16 %v246
        %v292 = vunpack.c.l.b16 %v247
        %v293 = vunpack.c.l.b16 %v248
        %v294 = vunpack.c.l.b16 %v249
        %v295 = vunpack.c.l.b16 %v250
        %v296 = vunpack.c.l.b16 %v251
        %v297 = vunpack.c.l.b16 %v252
        %v298 = vunpack.c.l.b16 %v253
        %v299 = vpack.c.b16 %v284, %v283
        %v300 = vpack.c.b16 %v286, %v285
        %v301 = vpack.c.b16 %v288, %v287
        %v302 = vpack.c.b16 %v290, %v289
        %v303 = vpack.c.b16 %v292, %v291
        %v304 = vpack.c.b16 %v294, %v293
        %v305 = vpack.c.b16 %v296, %v295
        %v306 = vpack.c.b16 %v298, %v297
        %315 = vmatprep.subr.bf16.mxu0 0
        %316 = vmatpush1.bf16.msra.mxu0 %v299
        %317 = vmatprep.subr.bf16.mxu0 0
        %318 = vmatpush1.bf16.msra.mxu0 %v300
        %319 = vmatprep.subr.bf16.mxu0 0
        %320 = vmatpush1.bf16.msra.mxu0 %v301
        %321 = vmatprep.subr.bf16.mxu0 0
        %322 = vmatpush1.bf16.msra.mxu0 %v302
        %323 = vmatprep.subr.bf16.mxu0 0
        %324 = vmatpush1.bf16.msra.mxu0 %v303
        %325 = vmatprep.subr.bf16.mxu0 0
        %326 = vmatpush1.bf16.msra.mxu0 %v304
        %327 = vmatprep.subr.bf16.mxu0 0
        %328 = vmatpush1.bf16.msra.mxu0 %v305
        %329 = vmatprep.subr.bf16.mxu0 0
        %330 = vmatpush1.bf16.msra.mxu0 %v306
        %331 = vmatprep.subr.bf16.mxu0 0
        %332 = vmatpush1.bf16.msra.mxu0 0
        %333 = vmatprep.subr.bf16.mxu0 0
        %334 = vmatpush1.bf16.msra.mxu0 0
        %335 = vmatprep.subr.bf16.mxu0 0
        %336 = vmatpush1.bf16.msra.mxu0 0
        %337 = vmatprep.subr.bf16.mxu0 0
        %338 = vmatpush1.bf16.msra.mxu0 0
        %339 = vmatprep.subr.bf16.mxu0 0
        %340 = vmatpush1.bf16.msra.mxu0 0
        %341 = vmatprep.subr.bf16.mxu0 0
        %342 = vmatpush1.bf16.msra.mxu0 0
        %343 = vmatprep.subr.bf16.mxu0 0
        %344 = vmatpush1.bf16.msra.mxu0 0
        %345 = vmatprep.subr.bf16.mxu0 0
        %346 = vmatpush1.bf16.msra.mxu0 0
        %347 = vmatprep.mubr.bf16.mxu0 0
        %348 = vmatmul.mubr.bf16.gmra.mrb[0].mxu0 %v265
        %v349 = vpop.f32.mrb[0].mxu0
        %v350 = vadd.f32 %v259, %v349
        %v351 = vpop.f32.mrb[0].mxu0
        %v352 = vpop.f32.mrb[0].mxu0
        %v353 = vadd.f32 %v259, %v352
        %v354 = vpop.f32.mrb[0].mxu0
        %355 = vdwg.mxu0
        %v356 = vmul.f32 %v350, %v350
        %v357 = vmul.f32 %v353, %v353
        %v358 = vmul.f32 %v350, %v356
        %v359 = vmul.f32 %v353, %v357
        %v360 = vmul.f32 %v358, 0.044715
        %v361 = vmul.f32 %v359, 0.044715
        %v362 = vadd.f32 %v350, %v360
        %v363 = vadd.f32 %v353, %v361
        %v364 = vmul.f32 %v362, 0.7978846
        %v365 = vmul.f32 %v363, 0.7978846
        %v366 = vtanh.pop %v364
        %v367 = vtanh.pop %v365
        %v368 = vadd.f32 %v366, 1.0
        %v369 = vadd.f32 %v367, 1.0
        %v370 = vmul.f32 %v368, 0.5
        %v371 = vmul.f32 %v369, 0.5
        %v372 = vmul.f32 %v350, %v370
        %v373 = vmul.f32 %v353, %v371
        %v374 = vld [vmem:[#allocation2] sm:$0xff]
        %v375 = vld [vmem:[#allocation2 + $0x8] sm:$0xff]
        %v376 = vpack.c.bf16 %v373, %v372
        %v377 = vld [vmem:[%s3] sm:$0xf]
        %v378 = vld [vmem:[%s3 + $0x4] sm:$0xf]
        %v379 = vld [vmem:[%s3 + $0x8] sm:$0xf]
        %v380 = vld [vmem:[%s3 + $0xc] sm:$0xf]
        %v381 = vld [vmem:[%s3 + $0x10] sm:$0xf]
        %v382 = vld [vmem:[%s3 + $0x14] sm:$0xf]
        %v383 = vld [vmem:[%s3 + $0x18] sm:$0xf]
        %v384 = vld [vmem:[%s3 + $0x1c] sm:$0xf]
        %v385 = vld [vmem:[%s3 + $0x20] sm:$0xf]
        %v386 = vld [vmem:[%s3 + $0x24] sm:$0xf]
        %v387 = vld [vmem:[%s3 + $0x28] sm:$0xf]
        %v388 = vld [vmem:[%s3 + $0x2c] sm:$0xf]
        %v389 = vld [vmem:[%s3 + $0x30] sm:$0xf]
        %v390 = vld [vmem:[%s3 + $0x34] sm:$0xf]
        %v391 = vld [vmem:[%s3 + $0x38] sm:$0xf]
        %v392 = vld [vmem:[%s3 + $0x3c] sm:$0xf]
        %v409 = vunpack.c.l.b16 %v377
        %v410 = vunpack.c.l.b16 %v378
        %v411 = vunpack.c.l.b16 %v379
        %v412 = vunpack.c.l.b16 %v380
        %v413 = vunpack.c.l.b16 %v381
        %v414 = vunpack.c.l.b16 %v382
        %v415 = vunpack.c.l.b16 %v383
        %v416 = vunpack.c.l.b16 %v384
        %v417 = vunpack.c.l.b16 %v385
        %v418 = vunpack.c.l.b16 %v386
        %v419 = vunpack.c.l.b16 %v387
        %v420 = vunpack.c.l.b16 %v388
        %v421 = vunpack.c.l.b16 %v389
        %v422 = vunpack.c.l.b16 %v390
        %v423 = vunpack.c.l.b16 %v391
        %v424 = vunpack.c.l.b16 %v392
        %v425 = vpack.c.b16 %v410, %v409
        %v426 = vpack.c.b16 %v412, %v411
        %v427 = vpack.c.b16 %v414, %v413
        %v428 = vpack.c.b16 %v416, %v415
        %v429 = vpack.c.b16 %v418, %v417
        %v430 = vpack.c.b16 %v420, %v419
        %v431 = vpack.c.b16 %v422, %v421
        %v432 = vpack.c.b16 %v424, %v423
        %441 = vmatprep.subr.bf16.mxu0 0
        %442 = vmatpush1.bf16.msra.mxu0 %v425
        %443 = vmatprep.subr.bf16.mxu0 0
        %444 = vmatpush1.bf16.msra.mxu0 %v426
        %445 = vmatprep.subr.bf16.mxu0 0
        %446 = vmatpush1.bf16.msra.mxu0 %v427
        %447 = vmatprep.subr.bf16.mxu0 0
        %448 = vmatpush1.bf16.msra.mxu0 %v428
        %449 = vmatprep.subr.bf16.mxu0 0
        %450 = vmatpush1.bf16.msra.mxu0 %v429
        %451 = vmatprep.subr.bf16.mxu0 0
        %452 = vmatpush1.bf16.msra.mxu0 %v430
        %453 = vmatprep.subr.bf16.mxu0 0
        %454 = vmatpush1.bf16.msra.mxu0 %v431
        %455 = vmatprep.subr.bf16.mxu0 0
        %456 = vmatpush1.bf16.msra.mxu0 %v432
        %457 = vmatprep.subr.bf16.mxu0 0
        %458 = vmatpush1.bf16.msra.mxu0 0
        %459 = vmatprep.subr.bf16.mxu0 0
        %460 = vmatpush1.bf16.msra.mxu0 0
        %461 = vmatprep.subr.bf16.mxu0 0
        %462 = vmatpush1.bf16.msra.mxu0 0
        %463 = vmatprep.subr.bf16.mxu0 0
        %464 = vmatpush1.bf16.msra.mxu0 0
        %465 = vmatprep.subr.bf16.mxu0 0
        %466 = vmatpush1.bf16.msra.mxu0 0
        %467 = vmatprep.subr.bf16.mxu0 0
        %468 = vmatpush1.bf16.msra.mxu0 0
        %469 = vmatprep.subr.bf16.mxu0 0
        %470 = vmatpush1.bf16.msra.mxu0 0
        %471 = vmatprep.subr.bf16.mxu0 0
        %472 = vmatpush1.bf16.msra.mxu0 0
        %473 = vmatprep.mubr.bf16.mxu0 0
        %474 = vmatmul.mubr.bf16.gmra.mrb[0].mxu0 %v376
        %v475 = vpop.f32.mrb[0].mxu0
        %v476 = vadd.f32 0.0, %v475
        %v477 = vpop.f32.mrb[0].mxu0
        %v478 = vpop.f32.mrb[0].mxu0
        %v479 = vadd.f32 0.0, %v478
        %v480 = vpop.f32.mrb[0].mxu0
        %481 = vdwg.mxu0
        %v482 = vadd.f32 %v374, %v476
        %v483 = vadd.f32 %v375, %v479
        %484 = vst [vmem:[#allocation2] sm:$0xff] %v482
        %485 = vst [vmem:[#allocation2 + $0x8] sm:$0xff] %v483
        %v486 = vld [vmem:[#allocation2] sm:$0xff]
        %v487 = vld [vmem:[#allocation2 + $0x8] sm:$0xff]
        %488 = vst [vmem:[%s218] sm:$0xff] %v486
        %489 = vst [vmem:[%s218 + $0x8] sm:$0xff] %v487
        %s490 = sand.u32 %s137, 1
        %s491 = scalar_lea.sflag [#allocation4], %s490
        %s492 = sand.u32 %s137, 1
        %s493 = smul.addr %s492, 16
        %s494 = scalar_lea.vmem [#allocation3], %s493
        // Predicated region
        $region41: #{feed_forward.1} parent=39 // pred_check
          %p495 = pneg %p147
        $region42: #{feed_forward.1} parent=39 // pred_check_branch
          %497 = sbr.rel (%p495) target = $region44
        $region43: #{feed_forward.1} parent=39 // pred_region
          %s498 = smul.u32 2, %s19
          %s500 = ssub.s32 256, 256
          %501 = vsyncadd %s491, %s500
          %s502 = smul.addr %s498, 128
          %s503 = scalar_lea.hbm %s5, %s502
          %s504 = sshll.u32 %s494, 4
          %s505 = int_to_ptr.vmem [resolvable:$true] %s504
          %510 = dma.vmem_to_hbm [thread:$0]  %s505, 256, %s503, %s491, 128, 128, 8
        $region44: #{feed_forward.1} parent=39 // pred_fallthru
          _
      $region40: #{feed_forward.1} parent=5 // pred_fallthru
        _
      %p511 = scmp.le.s32.totalorder 2, %s14
      // Predicated region
      $region45: #{feed_forward.1} parent=5 // pred_check
        %p512 = pneg %p511
      $region46: #{feed_forward.1} parent=5 // pred_check_branch
        %514 = sbr.rel (%p512) target = $region48
      $region47: #{feed_forward.1} parent=5 // pred_region
        %s515 = ssub.s32 %s14, 2
        // Predicated region
        $region49: #{feed_forward.1} parent=47 // pred_check
          %p516 = pneg %p153
        $region50: #{feed_forward.1} parent=47 // pred_check_branch
          %518 = sbr.rel (%p516) target = $region52
        $region51: #{feed_forward.1} parent=47 // pred_region
          %s519 = sand.u32 %s138, 1
          %s520 = scalar_lea.sflag [#allocation4], %s519
          %s521 = sand.u32 %s138, 1
          %s522 = smul.addr %s521, 16
          %s523 = scalar_lea.vmem [#allocation3], %s522
          %524 = dma.done %s520, 256
        $region52: #{feed_forward.1} parent=47 // pred_fallthru
          _
      $region48: #{feed_forward.1} parent=5 // pred_fallthru
        _
    $region6: #{feed_forward.1} parent=1 // loop_footer
      %s18 = sadd.s32 1, %s14
    $region7: #{feed_forward.1} parent=1 // loop_footer_branch
      %13 = sbr.rel target = $region3
    $region8: #{feed_forward.1} parent=1 // loop_exit
      _
    %525 = vsyncpa [#allocation4], 1
    %s526 = scalar_lea.sflag [#allocation4], 1
    %527 = vsyncpa %s526, 1

</llo_original>
